<compile_context>
chip_gen: v6e
topology: v6e:2x2x1
jax: 0.10.0
libtpu: 0.0.40
codegen_flags: <defaults>
</compile_context>

<pallas_src>
import functools

import jax
import jax.numpy as jnp
from jax.experimental import pallas as pl
from jax.experimental.pallas import tpu as pltpu

KH = KW = 4
STRIDE = 2
PAD = 1
EPS = 1e-5
NEG_SLOPE = 0.2


def _round_up(x, m):
    return (x + m - 1) // m * m


def _basic_block_kernel(x_ref, w_ref, aux_ref, o_ref, col_ref, *, owp, norm, inv_p):
    """One (batch, Cout-tile) grid step.

    x_ref:   (1, 4, Cin, Qpad)    stride-phase-split, spatially flattened padded input
    w_ref:   (TC, KH*KW*Cin)      folded conv weights for this Cout tile
    aux_ref: (1, Qout)  validity mask   if norm   /   (TC, 1) conv bias  if not norm
    o_ref:   (1, TC, Qout)        Qout = round_up(OH*(OW+1), 128): one garbage column
                                  per output row + lane padding, sliced off host-side
    col_ref: (KH*KW*Cin, Qout)    VMEM im2col staging scratch (persists across Cout tiles)
    """
    cin = x_ref.shape[2]
    _, tc, q_out = o_ref.shape

    # Stage the 16 statically-shifted slices once per batch element: the input block's
    # index_map depends only on n, and the scratch persists across the inner Cout axis.
    @pl.when(pl.program_id(1) == 0)
    def _stage():
        for kh in range(KH):
            for kw in range(KW):
                ph, a = kh % STRIDE, kh // STRIDE
                pw, b = kw % STRIDE, kw // STRIDE
                phase = ph * STRIDE + pw
                shift = a * owp + b
                t = kh * KW + kw
                col_ref[pl.ds(t * cin, cin), :] = x_ref[0, phase, :, pl.ds(shift, q_out)]

    # Single folded contraction: (TC, 16*Cin) @ (16*Cin, Qout) with f32 accumulation.
    acc = jnp.dot(w_ref[...], col_ref[...], preferred_element_type=jnp.float32)

    if norm:
        # InstanceNorm2d (affine=False): two-pass stats over the valid lanes only.
        # Conv bias is not applied here — it is exactly cancelled by the mean subtraction.
        mask = aux_ref[...]                                     # (1, Qout) of {0., 1.}
        mean = jnp.sum(acc * mask, axis=1, keepdims=True) * inv_p
        d = (acc - mean) * mask
        var = jnp.sum(d * d, axis=1, keepdims=True) * inv_p
        y = (acc - mean) * jax.lax.rsqrt(var + EPS)
    else:
        y = acc + aux_ref[...]                                  # (TC, 1) bias broadcast

    # LeakyReLU(0.2).  TODO(synk): emit bf16 output when the downstream consumer is bf16.
    o_ref[0] = jnp.where(y >= 0, y, NEG_SLOPE * y).astype(o_ref.dtype)


def basic_block(x, weight, bias, norm=True, compute_dtype=jnp.float32):
    """x: (N, Cin, H, W). weight: (Cout, Cin, KH, KW). bias: (Cout,).

    Returns (N, Cout, H//2, W//2) f32, matching the PyTorch BasicBlock forward.
    """
    N, Cin, H, W = x.shape
    Cout = weight.shape[0]
    OH = (H + 2 * PAD - KH) // STRIDE + 1
    OW = (W + 2 * PAD - KW) // STRIDE + 1
    OHp, OWp = OH + 1, OW + 1              # stride-phase image spatial dims
    Q = OHp * OWp                          # flat phase-image length
    Qout = OH * OWp                        # output rows incl. one garbage column each
    Qout_pad = _round_up(Qout, 128)        # lane-dense output block
    Qpad = _round_up(Qout_pad + OWp + 1, 128)   # slack so (q + shift) stays in range
    K = KH * KW * Cin

    # Cout tiling: free split (per-channel norm stats), gives megacore a second axis
    # and bounds the per-step out/acc footprint.
    TC = min(Cout, 128)
    Cout_pad = _round_up(Cout, TC)
    n_ct = Cout_pad // TC

    # --- host prep: pad + stride-phase split (same total bytes as input, no 16x
    # im2col inflation in HBM).  See TODO above for moving this DMA in-kernel.
    xp = jnp.pad(x, ((0, 0), (0, 0), (PAD, PAD), (PAD, PAD)))
    phases = [xp[:, :, ph::STRIDE, pw::STRIDE]
              for ph in range(STRIDE) for pw in range(STRIDE)]      # (N, Cin, OHp, OWp)
    xph = jnp.stack(phases, axis=1).reshape(N, STRIDE * STRIDE, Cin, Q)
    xph = jnp.pad(xph, ((0, 0), (0, 0), (0, 0), (0, Qpad - Q))).astype(compute_dtype)

    # Folded weights: column t*Cin + ci matches scratch row t*Cin + ci (t = kh*KW + kw).
    w_flat = jnp.transpose(weight, (0, 2, 3, 1)).reshape(Cout, K)
    w_flat = jnp.pad(w_flat, ((0, Cout_pad - Cout), (0, 0))).astype(compute_dtype)

    if norm:
        q_idx = jnp.arange(Qout_pad)
        aux = (((q_idx % OWp) < OW) & (q_idx < Qout)).astype(jnp.float32).reshape(1, Qout_pad)
        aux_spec = pl.BlockSpec((1, Qout_pad), lambda n, c: (0, 0))
        inv_p = 1.0 / float(OH * OW)
    else:
        aux = jnp.pad(bias.astype(jnp.float32), (0, Cout_pad - Cout)).reshape(Cout_pad, 1)
        aux_spec = pl.BlockSpec((TC, 1), lambda n, c: (c, 0))
        inv_p = 1.0

    kernel = functools.partial(_basic_block_kernel, owp=OWp, norm=norm, inv_p=inv_p)

    # Explicit VMEM budget: double-buffered blocks + im2col scratch + acc headroom.
    isz = jnp.dtype(compute_dtype).itemsize
    blocks = (STRIDE * STRIDE * Cin * Qpad * isz          # input block
              + TC * K * isz                              # weight block
              + TC * Qout_pad * 4                         # output block
              + Qout_pad * 4)                             # aux block
    vmem_needed = 2 * blocks + K * Qout_pad * isz + 4 * TC * Qout_pad * 4 + (1 << 20)
    vmem_limit = int(min(max(2 * vmem_needed, 32 << 20), 128 << 20))

    out = pl.pallas_call(
        kernel,
        out_shape=jax.ShapeDtypeStruct((N, Cout_pad, Qout_pad), jnp.float32),
        grid_spec=pltpu.PrefetchScalarGridSpec(
            num_scalar_prefetch=0,
            grid=(N, n_ct),
            in_specs=[
                pl.BlockSpec((1, STRIDE * STRIDE, Cin, Qpad), lambda n, c: (n, 0, 0, 0)),
                pl.BlockSpec((TC, K), lambda n, c: (c, 0)),
                aux_spec,
            ],
            out_specs=pl.BlockSpec((1, TC, Qout_pad), lambda n, c: (n, c, 0)),
            scratch_shapes=[pltpu.VMEM((K, Qout_pad), compute_dtype)],
        ),
        compiler_params=pltpu.CompilerParams(
            # Cout axis is 'arbitrary' so the once-per-n im2col staging in scratch is
            # valid; N is the megacore-parallel axis.
            dimension_semantics=("parallel", "arbitrary"),
            vmem_limit_bytes=vmem_limit,
        ),
    )(xph, w_flat, aux)

    # (N, Cout_pad, Qout_pad) -> drop padded channels/lanes + garbage column; already NCHW.
    out = out[:, :Cout, :Qout].reshape(N, Cout, OH, OWp)[:, :, :, :OW]
    return out


def _reference(x, weight, bias, norm=True):
    y = jax.lax.conv_general_dilated(
        x, weight, window_strides=(STRIDE, STRIDE),
        padding=((PAD, PAD), (PAD, PAD)),
        dimension_numbers=("NCHW", "OIHW", "NCHW"))
    y = y + bias.reshape(1, -1, 1, 1)
    if norm:
        mean = jnp.mean(y, axis=(2, 3), keepdims=True)
        var = jnp.mean((y - mean) ** 2, axis=(2, 3), keepdims=True)
        y = (y - mean) * jax.lax.rsqrt(var + EPS)
    return jnp.where(y >= 0, y, NEG_SLOPE * y)


if __name__ == "__main__":
    key = jax.random.PRNGKey(0)
    kx, kwt, kb = jax.random.split(key, 3)

    N, Cin, H, W = 2, 4, 16, 16
    Cout = 8

    x = jax.random.normal(kx, (N, Cin, H, W), dtype=jnp.float32)
    fan_in = Cin * KH * KW
    bound = 1.0 / (fan_in ** 0.5)
    weight = jax.random.uniform(kwt, (Cout, Cin, KH, KW), jnp.float32, -bound, bound)
    bias = jax.random.uniform(kb, (Cout,), jnp.float32, -bound, bound)

    # norm=True path (default BasicBlock)
    out = jax.block_until_ready(basic_block(x, weight, bias, norm=True))
    ref = _reference(x, weight, bias, norm=True)
    assert out.shape == (N, Cout, H // 2, W // 2)
    assert jnp.allclose(out, ref, atol=1e-4, rtol=1e-4)

    # norm=False path (conv + bias + LeakyReLU)
    out2 = jax.block_until_ready(basic_block(x, weight, bias, norm=False))
    ref2 = _reference(x, weight, bias, norm=False)
    assert jnp.allclose(out2, ref2, atol=1e-4, rtol=1e-4)

    print("KERNEL_OK")
</pallas_src>

<mosaic_0001>
module attributes {stable_mosaic.version = 11 : i64} {
  func.func @_basic_block_kernel(%arg0: i32, %arg1: i32, %arg2: memref<1x4x4x256xf32, #tpu.memory_space<vmem>>, %arg3: memref<8x64xf32, #tpu.memory_space<vmem>>, %arg4: memref<1x128xf32, #tpu.memory_space<vmem>>, %arg5: memref<1x8x128xf32, #tpu.memory_space<vmem>>, %arg6: memref<64x128xf32, #tpu.memory_space<vmem>>) attributes {dimension_semantics = [#tpu.dimension_semantics<parallel>, #tpu.dimension_semantics<arbitrary>], iteration_bounds = array<i64: 2, 1>, scalar_prefetch = 0 : i64, scratch_operands = 1 : i64, tpu.core_type = #tpu.core_type<tc>, window_params = [{transform_indices = @transform_0, window_bounds = array<i64: 1, 4, 4, 256>}, {transform_indices = @transform_1, window_bounds = array<i64: 8, 64>}, {pipeline_mode = #tpu.pipeline_mode<synchronous>, transform_indices = @transform_2, window_bounds = array<i64: 1, 128>}, {transform_indices = @transform_3, window_bounds = array<i64: 1, 8, 128>}]} {
    %c0_i32 = arith.constant 0 : i32
    %0 = arith.cmpi eq, %arg1, %c0_i32 : i32
    %1 = arith.extui %0 : i1 to i32
    %c0_i32_0 = arith.constant 0 : i32
    %2 = arith.cmpi ne, %1, %c0_i32_0 : i32
    scf.if %2 {
      %c0_16 = arith.constant 0 : index
      %c0_17 = arith.constant 0 : index
      %c0_18 = arith.constant 0 : index
      %c0_19 = arith.constant 0 : index
      %37 = vector.load %arg2[%c0_16, %c0_17, %c0_18, %c0_19] : memref<1x4x4x256xf32, #tpu.memory_space<vmem>>, vector<1x1x4x128xf32>
      %38 = vector.shape_cast %37 : vector<1x1x4x128xf32> to vector<4x128xf32>
      %c0_20 = arith.constant 0 : index
      %c0_21 = arith.constant 0 : index
      %39 = vector.load %arg6[%c0_20, %c0_21] : memref<64x128xf32, #tpu.memory_space<vmem>>, vector<4x128xf32>
      tpu.vector_store %arg6[%c0_20, %c0_21], %38 {strides = array<i32>} : memref<64x128xf32, #tpu.memory_space<vmem>>, vector<4x128xf32>,
      %c0_22 = arith.constant 0 : index
      %c1 = arith.constant 1 : index
      %c0_23 = arith.constant 0 : index
      %c0_24 = arith.constant 0 : index
      %40 = vector.load %arg2[%c0_22, %c1, %c0_23, %c0_24] : memref<1x4x4x256xf32, #tpu.memory_space<vmem>>, vector<1x1x4x128xf32>
      %41 = vector.shape_cast %40 : vector<1x1x4x128xf32> to vector<4x128xf32>
      %c4 = arith.constant 4 : index
      %c0_25 = arith.constant 0 : index
      %42 = vector.load %arg6[%c4, %c0_25] : memref<64x128xf32, #tpu.memory_space<vmem>>, vector<4x128xf32>
      tpu.vector_store %arg6[%c4, %c0_25], %41 {strides = array<i32>} : memref<64x128xf32, #tpu.memory_space<vmem>>, vector<4x128xf32>,
      %c0_26 = arith.constant 0 : index
      %c0_27 = arith.constant 0 : index
      %c0_28 = arith.constant 0 : index
      %c1_29 = arith.constant 1 : index
      %43 = vector.load %arg2[%c0_26, %c0_27, %c0_28, %c1_29] : memref<1x4x4x256xf32, #tpu.memory_space<vmem>>, vector<1x1x4x128xf32>
      %44 = vector.shape_cast %43 : vector<1x1x4x128xf32> to vector<4x128xf32>
      %c8 = arith.constant 8 : index
      %c0_30 = arith.constant 0 : index
      %45 = vector.load %arg6[%c8, %c0_30] : memref<64x128xf32, #tpu.memory_space<vmem>>, vector<4x128xf32>
      tpu.vector_store %arg6[%c8, %c0_30], %44 {strides = array<i32>} : memref<64x128xf32, #tpu.memory_space<vmem>>, vector<4x128xf32>,
      %c0_31 = arith.constant 0 : index
      %c1_32 = arith.constant 1 : index
      %c0_33 = arith.constant 0 : index
      %c1_34 = arith.constant 1 : index
      %46 = vector.load %arg2[%c0_31, %c1_32, %c0_33, %c1_34] : memref<1x4x4x256xf32, #tpu.memory_space<vmem>>, vector<1x1x4x128xf32>
      %47 = vector.shape_cast %46 : vector<1x1x4x128xf32> to vector<4x128xf32>
      %c12 = arith.constant 12 : index
      %c0_35 = arith.constant 0 : index
      %48 = vector.load %arg6[%c12, %c0_35] : memref<64x128xf32, #tpu.memory_space<vmem>>, vector<4x128xf32>
      tpu.vector_store %arg6[%c12, %c0_35], %47 {strides = array<i32>} : memref<64x128xf32, #tpu.memory_space<vmem>>, vector<4x128xf32>,
      %c0_36 = arith.constant 0 : index
      %c2 = arith.constant 2 : index
      %c0_37 = arith.constant 0 : index
      %c0_38 = arith.constant 0 : index
      %49 = vector.load %arg2[%c0_36, %c2, %c0_37, %c0_38] : memref<1x4x4x256xf32, #tpu.memory_space<vmem>>, vector<1x1x4x128xf32>
      %50 = vector.shape_cast %49 : vector<1x1x4x128xf32> to vector<4x128xf32>
      %c16 = arith.constant 16 : index
      %c0_39 = arith.constant 0 : index
      %51 = vector.load %arg6[%c16, %c0_39] : memref<64x128xf32, #tpu.memory_space<vmem>>, vector<4x128xf32>
      tpu.vector_store %arg6[%c16, %c0_39], %50 {strides = array<i32>} : memref<64x128xf32, #tpu.memory_space<vmem>>, vector<4x128xf32>,
      %c0_40 = arith.constant 0 : index
      %c3 = arith.constant 3 : index
      %c0_41 = arith.constant 0 : index
      %c0_42 = arith.constant 0 : index
      %52 = vector.load %arg2[%c0_40, %c3, %c0_41, %c0_42] : memref<1x4x4x256xf32, #tpu.memory_space<vmem>>, vector<1x1x4x128xf32>
      %53 = vector.shape_cast %52 : vector<1x1x4x128xf32> to vector<4x128xf32>
      %c20 = arith.constant 20 : index
      %c0_43 = arith.constant 0 : index
      %54 = vector.load %arg6[%c20, %c0_43] : memref<64x128xf32, #tpu.memory_space<vmem>>, vector<4x128xf32>
      tpu.vector_store %arg6[%c20, %c0_43], %53 {strides = array<i32>} : memref<64x128xf32, #tpu.memory_space<vmem>>, vector<4x128xf32>,
      %c0_44 = arith.constant 0 : index
      %c2_45 = arith.constant 2 : index
      %c0_46 = arith.constant 0 : index
      %c1_47 = arith.constant 1 : index
      %55 = vector.load %arg2[%c0_44, %c2_45, %c0_46, %c1_47] : memref<1x4x4x256xf32, #tpu.memory_space<vmem>>, vector<1x1x4x128xf32>
      %56 = vector.shape_cast %55 : vector<1x1x4x128xf32> to vector<4x128xf32>
      %c24 = arith.constant 24 : index
      %c0_48 = arith.constant 0 : index
      %57 = vector.load %arg6[%c24, %c0_48] : memref<64x128xf32, #tpu.memory_space<vmem>>, vector<4x128xf32>
      tpu.vector_store %arg6[%c24, %c0_48], %56 {strides = array<i32>} : memref<64x128xf32, #tpu.memory_space<vmem>>, vector<4x128xf32>,
      %c0_49 = arith.constant 0 : index
      %c3_50 = arith.constant 3 : index
      %c0_51 = arith.constant 0 : index
      %c1_52 = arith.constant 1 : index
      %58 = vector.load %arg2[%c0_49, %c3_50, %c0_51, %c1_52] : memref<1x4x4x256xf32, #tpu.memory_space<vmem>>, vector<1x1x4x128xf32>
      %59 = vector.shape_cast %58 : vector<1x1x4x128xf32> to vector<4x128xf32>
      %c28 = arith.constant 28 : index
      %c0_53 = arith.constant 0 : index
      %60 = vector.load %arg6[%c28, %c0_53] : memref<64x128xf32, #tpu.memory_space<vmem>>, vector<4x128xf32>
      tpu.vector_store %arg6[%c28, %c0_53], %59 {strides = array<i32>} : memref<64x128xf32, #tpu.memory_space<vmem>>, vector<4x128xf32>,
      %c0_54 = arith.constant 0 : index
      %c0_55 = arith.constant 0 : index
      %c0_56 = arith.constant 0 : index
      %c9 = arith.constant 9 : index
      %61 = vector.load %arg2[%c0_54, %c0_55, %c0_56, %c9] : memref<1x4x4x256xf32, #tpu.memory_space<vmem>>, vector<1x1x4x128xf32>
      %62 = vector.shape_cast %61 : vector<1x1x4x128xf32> to vector<4x128xf32>
      %c32 = arith.constant 32 : index
      %c0_57 = arith.constant 0 : index
      %63 = vector.load %arg6[%c32, %c0_57] : memref<64x128xf32, #tpu.memory_space<vmem>>, vector<4x128xf32>
      tpu.vector_store %arg6[%c32, %c0_57], %62 {strides = array<i32>} : memref<64x128xf32, #tpu.memory_space<vmem>>, vector<4x128xf32>,
      %c0_58 = arith.constant 0 : index
      %c1_59 = arith.constant 1 : index
      %c0_60 = arith.constant 0 : index
      %c9_61 = arith.constant 9 : index
      %64 = vector.load %arg2[%c0_58, %c1_59, %c0_60, %c9_61] : memref<1x4x4x256xf32, #tpu.memory_space<vmem>>, vector<1x1x4x128xf32>
      %65 = vector.shape_cast %64 : vector<1x1x4x128xf32> to vector<4x128xf32>
      %c36 = arith.constant 36 : index
      %c0_62 = arith.constant 0 : index
      %66 = vector.load %arg6[%c36, %c0_62] : memref<64x128xf32, #tpu.memory_space<vmem>>, vector<4x128xf32>
      tpu.vector_store %arg6[%c36, %c0_62], %65 {strides = array<i32>} : memref<64x128xf32, #tpu.memory_space<vmem>>, vector<4x128xf32>,
      %c0_63 = arith.constant 0 : index
      %c0_64 = arith.constant 0 : index
      %c0_65 = arith.constant 0 : index
      %c10 = arith.constant 10 : index
      %67 = vector.load %arg2[%c0_63, %c0_64, %c0_65, %c10] : memref<1x4x4x256xf32, #tpu.memory_space<vmem>>, vector<1x1x4x128xf32>
      %68 = vector.shape_cast %67 : vector<1x1x4x128xf32> to vector<4x128xf32>
      %c40 = arith.constant 40 : index
      %c0_66 = arith.constant 0 : index
      %69 = vector.load %arg6[%c40, %c0_66] : memref<64x128xf32, #tpu.memory_space<vmem>>, vector<4x128xf32>
      tpu.vector_store %arg6[%c40, %c0_66], %68 {strides = array<i32>} : memref<64x128xf32, #tpu.memory_space<vmem>>, vector<4x128xf32>,
      %c0_67 = arith.constant 0 : index
      %c1_68 = arith.constant 1 : index
      %c0_69 = arith.constant 0 : index
      %c10_70 = arith.constant 10 : index
      %70 = vector.load %arg2[%c0_67, %c1_68, %c0_69, %c10_70] : memref<1x4x4x256xf32, #tpu.memory_space<vmem>>, vector<1x1x4x128xf32>
      %71 = vector.shape_cast %70 : vector<1x1x4x128xf32> to vector<4x128xf32>
      %c44 = arith.constant 44 : index
      %c0_71 = arith.constant 0 : index
      %72 = vector.load %arg6[%c44, %c0_71] : memref<64x128xf32, #tpu.memory_space<vmem>>, vector<4x128xf32>
      tpu.vector_store %arg6[%c44, %c0_71], %71 {strides = array<i32>} : memref<64x128xf32, #tpu.memory_space<vmem>>, vector<4x128xf32>,
      %c0_72 = arith.constant 0 : index
      %c2_73 = arith.constant 2 : index
      %c0_74 = arith.constant 0 : index
      %c9_75 = arith.constant 9 : index
      %73 = vector.load %arg2[%c0_72, %c2_73, %c0_74, %c9_75] : memref<1x4x4x256xf32, #tpu.memory_space<vmem>>, vector<1x1x4x128xf32>
      %74 = vector.shape_cast %73 : vector<1x1x4x128xf32> to vector<4x128xf32>
      %c48 = arith.constant 48 : index
      %c0_76 = arith.constant 0 : index
      %75 = vector.load %arg6[%c48, %c0_76] : memref<64x128xf32, #tpu.memory_space<vmem>>, vector<4x128xf32>
      tpu.vector_store %arg6[%c48, %c0_76], %74 {strides = array<i32>} : memref<64x128xf32, #tpu.memory_space<vmem>>, vector<4x128xf32>,
      %c0_77 = arith.constant 0 : index
      %c3_78 = arith.constant 3 : index
      %c0_79 = arith.constant 0 : index
      %c9_80 = arith.constant 9 : index
      %76 = vector.load %arg2[%c0_77, %c3_78, %c0_79, %c9_80] : memref<1x4x4x256xf32, #tpu.memory_space<vmem>>, vector<1x1x4x128xf32>
      %77 = vector.shape_cast %76 : vector<1x1x4x128xf32> to vector<4x128xf32>
      %c52 = arith.constant 52 : index
      %c0_81 = arith.constant 0 : index
      %78 = vector.load %arg6[%c52, %c0_81] : memref<64x128xf32, #tpu.memory_space<vmem>>, vector<4x128xf32>
      tpu.vector_store %arg6[%c52, %c0_81], %77 {strides = array<i32>} : memref<64x128xf32, #tpu.memory_space<vmem>>, vector<4x128xf32>,
      %c0_82 = arith.constant 0 : index
      %c2_83 = arith.constant 2 : index
      %c0_84 = arith.constant 0 : index
      %c10_85 = arith.constant 10 : index
      %79 = vector.load %arg2[%c0_82, %c2_83, %c0_84, %c10_85] : memref<1x4x4x256xf32, #tpu.memory_space<vmem>>, vector<1x1x4x128xf32>
      %80 = vector.shape_cast %79 : vector<1x1x4x128xf32> to vector<4x128xf32>
      %c56 = arith.constant 56 : index
      %c0_86 = arith.constant 0 : index
      %81 = vector.load %arg6[%c56, %c0_86] : memref<64x128xf32, #tpu.memory_space<vmem>>, vector<4x128xf32>
      tpu.vector_store %arg6[%c56, %c0_86], %80 {strides = array<i32>} : memref<64x128xf32, #tpu.memory_space<vmem>>, vector<4x128xf32>,
      %c0_87 = arith.constant 0 : index
      %c3_88 = arith.constant 3 : index
      %c0_89 = arith.constant 0 : index
      %c10_90 = arith.constant 10 : index
      %82 = vector.load %arg2[%c0_87, %c3_88, %c0_89, %c10_90] : memref<1x4x4x256xf32, #tpu.memory_space<vmem>>, vector<1x1x4x128xf32>
      %83 = vector.shape_cast %82 : vector<1x1x4x128xf32> to vector<4x128xf32>
      %c60 = arith.constant 60 : index
      %c0_91 = arith.constant 0 : index
      %84 = vector.load %arg6[%c60, %c0_91] : memref<64x128xf32, #tpu.memory_space<vmem>>, vector<4x128xf32>
      tpu.vector_store %arg6[%c60, %c0_91], %83 {strides = array<i32>} : memref<64x128xf32, #tpu.memory_space<vmem>>, vector<4x128xf32>,
    } else {
    }
    %c0 = arith.constant 0 : index
    %c0_1 = arith.constant 0 : index
    %3 = vector.load %arg3[%c0, %c0_1] : memref<8x64xf32, #tpu.memory_space<vmem>>, vector<8x64xf32>
    %c0_2 = arith.constant 0 : index
    %c0_3 = arith.constant 0 : index
    %4 = vector.load %arg6[%c0_2, %c0_3] : memref<64x128xf32, #tpu.memory_space<vmem>>, vector<64x128xf32>
    %cst = arith.constant dense<0.000000e+00> : vector<8x128xf32>
    %5 = tpu.matmul %3, %4, %cst {dimension_numbers = #tpu.dot_dimension_numbers<[1], [0], [0], [1], [0, 0, 1, 1], [], []>} : vector<8x64xf32>, vector<64x128xf32>, vector<8x128xf32> -> vector<8x128xf32>
    %c0_4 = arith.constant 0 : index
    %c0_5 = arith.constant 0 : index
    %6 = vector.load %arg4[%c0_4, %c0_5] : memref<1x128xf32, #tpu.memory_space<vmem>>, vector<1x128xf32>
    %7 = vector.broadcast %6 : vector<1x128xf32> to vector<8x128xf32>
    %8 = arith.mulf %5, %7 : vector<8x128xf32>
    %cst_6 = arith.constant dense<0.000000e+00> : vector<8xf32>
    %9 = vector.multi_reduction <add>, %8, %cst_6 [1] : vector<8x128xf32> to vector<8xf32>
    %10 = vector.shape_cast %9 : vector<8xf32> to vector<8x1xf32>
    %cst_7 = arith.constant 1.562500e-02 : f32
    %11 = vector.broadcast %cst_7 : f32 to vector<8x1xf32>
    %12 = arith.mulf %10, %11 : vector<8x1xf32>
    %13 = vector.broadcast %12 : vector<8x1xf32> to vector<8x128xf32>
    %14 = arith.subf %5, %13 : vector<8x128xf32>
    %15 = vector.broadcast %6 : vector<1x128xf32> to vector<8x128xf32>
    %16 = arith.mulf %14, %15 : vector<8x128xf32>
    %17 = arith.mulf %16, %16 : vector<8x128xf32>
    %cst_8 = arith.constant dense<0.000000e+00> : vector<8xf32>
    %18 = vector.multi_reduction <add>, %17, %cst_8 [1] : vector<8x128xf32> to vector<8xf32>
    %19 = vector.shape_cast %18 : vector<8xf32> to vector<8x1xf32>
    %cst_9 = arith.constant 1.562500e-02 : f32
    %20 = vector.broadcast %cst_9 : f32 to vector<8x1xf32>
    %21 = arith.mulf %19, %20 : vector<8x1xf32>
    %22 = vector.broadcast %12 : vector<8x1xf32> to vector<8x128xf32>
    %23 = arith.subf %5, %22 : vector<8x128xf32>
    %cst_10 = arith.constant 9.99999974E-6 : f32
    %24 = vector.broadcast %cst_10 : f32 to vector<8x1xf32>
    %25 = arith.addf %21, %24 : vector<8x1xf32>
    %26 = math.rsqrt %25 : vector<8x1xf32>
    %27 = vector.broadcast %26 : vector<8x1xf32> to vector<8x128xf32>
    %28 = arith.mulf %23, %27 : vector<8x128xf32>
    %cst_11 = arith.constant 0.000000e+00 : f32
    %29 = vector.broadcast %cst_11 : f32 to vector<8x128xf32>
    %30 = arith.cmpf oge, %28, %29 : vector<8x128xf32>
    %cst_12 = arith.constant 2.000000e-01 : f32
    %31 = vector.broadcast %cst_12 : f32 to vector<8x128xf32>
    %32 = arith.mulf %31, %28 : vector<8x128xf32>
    %33 = arith.select %30, %28, %32 : vector<8x128xi1>, vector<8x128xf32>
    %c0_13 = arith.constant 0 : index
    %c0_14 = arith.constant 0 : index
    %c0_15 = arith.constant 0 : index
    %34 = vector.load %arg5[%c0_13, %c0_14, %c0_15] : memref<1x8x128xf32, #tpu.memory_space<vmem>>, vector<1x8x128xf32>
    %35 = vector.shape_cast %34 : vector<1x8x128xf32> to vector<8x128xf32>
    %36 = vector.shape_cast %33 : vector<8x128xf32> to vector<1x8x128xf32>
    tpu.vector_store %arg5[%c0_13, %c0_14, %c0_15], %36 {strides = array<i32>} : memref<1x8x128xf32, #tpu.memory_space<vmem>>, vector<1x8x128xf32>,
    return
  }
  func.func @transform_0(%arg0: i32, %arg1: i32) -> (i32, i32, i32, i32) {
    %c0_i32 = arith.constant 0 : i32
    %c0_i32_0 = arith.constant 0 : i32
    %c0_i32_1 = arith.constant 0 : i32
    %c0_i32_2 = arith.constant 0 : i32
    return %arg0, %c0_i32, %c0_i32_0, %c0_i32_1 : i32, i32, i32, i32
  }
  func.func @transform_1(%arg0: i32, %arg1: i32) -> (i32, i32) {
    %c0_i32 = arith.constant 0 : i32
    %c0_i32_0 = arith.constant 0 : i32
    return %arg1, %c0_i32 : i32, i32
  }
  func.func @transform_2(%arg0: i32, %arg1: i32) -> (i32, i32) {
    %c0_i32 = arith.constant 0 : i32
    %c0_i32_0 = arith.constant 0 : i32
    %c0_i32_1 = arith.constant 0 : i32
    return %c0_i32, %c0_i32_0 : i32, i32
  }
  func.func @transform_3(%arg0: i32, %arg1: i32) -> (i32, i32, i32) {
    %c0_i32 = arith.constant 0 : i32
    %c0_i32_0 = arith.constant 0 : i32
    return %arg0, %arg1, %c0_i32 : i32, i32, i32
  }
}

</mosaic_0001>

<llo_original>
// kernel: tpu_custom_call.1
$region0: #{tpu_custom_call.1}
  #allocation0 [shape = 'u32[]', space=smem, size = 0x4, offset = 0x4, fixed_abs, tag = 'smem constant byte address 0x4 - core index']
  #allocation1 [shape = 'u32[144,128]{1,0:T(1,128)}', space=vmem, size = 0x12000, scoped, tag = 'internal scratch']
  #allocation2 [shape = 'f32[64,128]{1,0:T(8,128)}', space=vmem, size = 0x8000, scoped, tag = 'scratch operand']
  %s0 = inlined_call_operand.hbm [shape: f32[2,4,4,256], index: 0, kind: input, shape index: {}]
  %s1 = inlined_call_operand.hbm [shape: f32[8,64], index: 1, kind: input, shape index: {}]
  %s2 = inlined_call_operand.vmem [shape: f32[1,128], index: 2, kind: input, shape index: {}]
  %s3 = inlined_call_operand.hbm [shape: f32[2,8,128], index: 3, kind: output, shape index: {}]
  %s4 = sld [smem:[#allocation0]]
  $region57: #{tpu_custom_call.1} parent=0
    _
  %s6 = ssub.s32 1, %s4
  %s7 = scalar_select 0, %s6, %s4
  $region1: #{tpu_custom_call.1} parent=0
    #allocation3 [shape = 'u8[32768]{0}', space=vmem, size = 0x8000, scoped, tag = 'input window, operand 0']
    #allocation4 [shape = 's32[2]{0}', space=sflag, size = 0x8, scoped, tag = 'scoped memory for tpu_custom_call.1']
    #allocation5 [shape = 's32[2]{0}', space=sflag, size = 0x8, scoped, tag = 'scoped memory for tpu_custom_call.1']
    #allocation6 [shape = 'u8[4096]{0}', space=vmem, size = 0x1000, scoped, tag = 'input window, operand 1, single buffered']
    #allocation7 [shape = 's32[1]{0}', space=sflag, size = 0x4, scoped, tag = 'scoped memory for tpu_custom_call.1']
    #allocation8 [shape = 'u8[8192]{0}', space=vmem, size = 0x2000, scoped, tag = 'output window, operand 0']
    %8 = vsyncpa [#allocation4], 0
    %s9 = scalar_lea.sflag [#allocation4], 1
    %10 = vsyncpa %s9, 0
    %11 = vsyncpa [#allocation7], 0
    %12 = vsyncpa [#allocation5], 0
    %s13 = scalar_lea.sflag [#allocation5], 1
    %14 = vsyncpa %s13, 0
    loop: start=0, step=1, limit=4
    $region2: #{tpu_custom_call.1} parent=1 // loop_pre_header
      _
    $region3: #{tpu_custom_call.1} parent=1 // loop_header
      %s16 = sphi 0, %s20
      %p17 = scmp.ge.s32.totalorder %s16, 4
      %s23 = sphi 0, %s35
      %s24 = sphi 0, %s31
      %s25 = sphi 0, %s23
      %s26 = sphi 0, %s24
      %s27 = sphi 0, %s25
      %s28 = sphi 0, %s26
      %s38 = sphi 0, %s40
      %s41 = sphi 0, %s38
      %s42 = sphi 0, %s41
      %s58 = sphi 0, %s42
      %s64 = sphi 0, %s66
      %s67 = sphi 0, %s64
      %s68 = sphi 0, %s67
      %s84 = sphi 0, %s68
      %s88 = sphi 0, %s88
      %s90 = sphi 0, %s88
      %s91 = sphi 0, %s90
      %s105 = sphi 0, %s91
      %s113 = sphi 0, %s115
      %s116 = sphi 0, %s113
      %s117 = sphi 0, %s116
      %s133 = sphi 0, %s117
    $region4: #{tpu_custom_call.1} parent=1 // loop_header_branch
      %19 = sbr.rel (%p17) target = $region8
    $region5: #{tpu_custom_call.1} parent=1 // loop_body
      %s21 = ssub.s32 %s16, 1
      %s22 = ssub.s32 %s16, 2
      %s29 = sadd.s32 1, %s24
      %p30 = scmp.ge.s32.totalorder %s29, 1
      %s31 = scalar_select %p30, 0, %s29
      %s32 = sadd.s32 1, %s23
      %s33 = scalar_select %p30, %s32, %s23
      %p34 = scmp.ge.s32.totalorder %s33, 2
      %s35 = scalar_select %p34, 0, %s33
      %s36 = ssub.s32 %s23, %s35
      %p37 = scmp.eq.s32.totalorder %s36, 0
      %s39 = sadd.s32 %s38, 1
      %s40 = scalar_select %p37, %s38, %s39
      %p43 = pneg %p37
      %p44 = scmp.eq.s32.totalorder %s16, 1
      %p45 = por %p43, %p44
      %p46 = scmp.ne.s32.totalorder %s38, %s41
      %p47 = scmp.eq.s32.totalorder %s16, 0
      %p48 = por %p46, %p47
      %p49 = scmp.ne.s32.totalorder %s38, %s41
      %p50 = scmp.eq.s32.totalorder %s21, 1
      %p51 = por %p49, %p50
      %p52 = scmp.ne.s32.totalorder %s41, %s42
      %p53 = scmp.eq.s32.totalorder %s21, 0
      %p54 = por %p52, %p53
      %p55 = scmp.ne.s32.totalorder %s41, %s42
      %p56 = scmp.eq.s32.totalorder %s22, 1
      %p57 = por %p55, %p56
      %p59 = scmp.ne.s32.totalorder %s42, %s58
      %p60 = scmp.eq.s32.totalorder %s22, 0
      %p61 = por %p59, %p60
      %s62 = ssub.s32 %s24, %s31
      %p63 = scmp.eq.s32.totalorder %s62, 0
      %s65 = sadd.s32 %s64, 1
      %s66 = scalar_select %p63, %s64, %s65
      %p69 = pneg %p63
      %p70 = scmp.eq.s32.totalorder %s16, 1
      %p71 = por %p69, %p70
      %p72 = scmp.ne.s32.totalorder %s64, %s67
      %p73 = scmp.eq.s32.totalorder %s16, 0
      %p74 = por %p72, %p73
      %p75 = scmp.ne.s32.totalorder %s64, %s67
      %p76 = scmp.eq.s32.totalorder %s21, 1
      %p77 = por %p75, %p76
      %p78 = scmp.ne.s32.totalorder %s67, %s68
      %p79 = scmp.eq.s32.totalorder %s21, 0
      %p80 = por %p78, %p79
      %p81 = scmp.ne.s32.totalorder %s67, %s68
      %p82 = scmp.eq.s32.totalorder %s22, 1
      %p83 = por %p81, %p82
      %p85 = scmp.ne.s32.totalorder %s68, %s84
      %p86 = scmp.eq.s32.totalorder %s22, 0
      %p87 = por %p85, %p86
      %s89 = sadd.s32 %s88, 1
      %p92 = scmp.eq.s32.totalorder %s16, 1
      %p93 = scmp.ne.s32.totalorder %s88, %s90
      %p94 = scmp.eq.s32.totalorder %s16, 0
      %p95 = por %p93, %p94
      %p96 = scmp.ne.s32.totalorder %s88, %s90
      %p97 = scmp.eq.s32.totalorder %s21, 1
      %p98 = por %p96, %p97
      %p99 = scmp.ne.s32.totalorder %s90, %s91
      %p100 = scmp.eq.s32.totalorder %s21, 0
      %p101 = por %p99, %p100
      %p102 = scmp.ne.s32.totalorder %s90, %s91
      %p103 = scmp.eq.s32.totalorder %s22, 1
      %p104 = por %p102, %p103
      %p106 = scmp.ne.s32.totalorder %s91, %s105
      %p107 = scmp.eq.s32.totalorder %s22, 0
      %p108 = por %p106, %p107
      %s109 = ssub.s32 %s23, %s35
      %s110 = ssub.s32 %s24, %s31
      %s111 = sor.u32 %s109, %s110
      %p112 = scmp.eq.s32.totalorder %s111, 0
      %s114 = sadd.s32 %s113, 1
      %s115 = scalar_select %p112, %s113, %s114
      %p118 = pneg %p112
      %p119 = scmp.eq.s32.totalorder %s16, 1
      %p120 = por %p118, %p119
      %p121 = scmp.ne.s32.totalorder %s113, %s116
      %p122 = scmp.eq.s32.totalorder %s16, 0
      %p123 = por %p121, %p122
      %p124 = scmp.ne.s32.totalorder %s113, %s116
      %p125 = scmp.eq.s32.totalorder %s21, 1
      %p126 = por %p124, %p125
      %p127 = scmp.ne.s32.totalorder %s116, %s117
      %p128 = scmp.eq.s32.totalorder %s21, 0
      %p129 = por %p127, %p128
      %p130 = scmp.ne.s32.totalorder %s116, %s117
      %p131 = scmp.eq.s32.totalorder %s22, 1
      %p132 = por %p130, %p131
      %p134 = scmp.ne.s32.totalorder %s117, %s133
      %p135 = scmp.eq.s32.totalorder %s22, 0
      %p136 = por %p134, %p135
      %p137 = scmp.le.s32.totalorder 1, %s16
      %p138 = scmp.lt.s32.totalorder %s16, 3
      %p139 = pnand %p137, %p138
      %p140 = pneg %p139
      // Predicated region
      $region9: #{tpu_custom_call.1} parent=5 // pred_check
        _
      $region10: #{tpu_custom_call.1} parent=5 // pred_check_branch
        %142 = sbr.rel (%p139) target = $region12
      $region11: #{tpu_custom_call.1} parent=5 // pred_region
        %s143 = ssub.s32 %s16, 1
        // Predicated region
        $region13: #{tpu_custom_call.1} parent=11 // pred_check
          %p144 = pneg %p80
        $region14: #{tpu_custom_call.1} parent=11 // pred_check_branch
          %146 = sbr.rel (%p144) target = $region16
        $region15: #{tpu_custom_call.1} parent=11 // pred_region
          %s148 = ssub.s32 128, 128
          %149 = vsyncadd [#allocation7], %s148
          %s150 = smul.addr %s26, 128
          %s151 = scalar_lea.hbm %s1, %s150
          %s153 = sshll.u32 [#allocation6], 4
          %s154 = int_to_ptr.vmem [resolvable:$true] %s153
          %156 = dma.hbm_to_vmem [thread:$0]  %s151, 128, %s154, [#allocation7]
        $region16: #{tpu_custom_call.1} parent=11 // pred_fallthru
          _
        // Predicated region
        $region17: #{tpu_custom_call.1} parent=11 // pred_check
          %p157 = pneg %p101
        $region18: #{tpu_custom_call.1} parent=11 // pred_check_branch
          %159 = sbr.rel (%p157) target = $region20
        $region19: #{tpu_custom_call.1} parent=11 // pred_region
          _
        $region20: #{tpu_custom_call.1} parent=11 // pred_fallthru
          _
      $region12: #{tpu_custom_call.1} parent=5 // pred_fallthru
        _
      %p160 = scmp.lt.s32.totalorder %s16, 2
      // Predicated region
      $region21: #{tpu_custom_call.1} parent=5 // pred_check
        %p161 = pneg %p160
      $region22: #{tpu_custom_call.1} parent=5 // pred_check_branch
        %163 = sbr.rel (%p161) target = $region24
      $region23: #{tpu_custom_call.1} parent=5 // pred_region
        // Predicated region
        $region25: #{tpu_custom_call.1} parent=23 // pred_check
          %p164 = pneg %p48
        $region26: #{tpu_custom_call.1} parent=23 // pred_check_branch
          %166 = sbr.rel (%p164) target = $region28
        $region27: #{tpu_custom_call.1} parent=23 // pred_region
          %s167 = sand.u32 %s38, 1
          %s168 = scalar_lea.sflag [#allocation4], %s167
          %s169 = sand.u32 %s38, 1
          %s170 = smul.addr %s169, 32
          %s171 = scalar_lea.vmem [#allocation3], %s170
          %s173 = ssub.s32 512, 512
          %174 = vsyncadd %s168, %s173
          %s175 = smul.addr %s23, 8
          %s176 = smul.addr %s175, 64
          %s177 = scalar_lea.hbm %s0, %s176
          %s178 = sshll.u32 %s171, 4
          %s179 = int_to_ptr.vmem [resolvable:$true] %s178
          %184 = dma.hbm_to_vmem [thread:$0]  %s177, 512, %s179, %s168, 128, 128, 8
        $region28: #{tpu_custom_call.1} parent=23 // pred_fallthru
          _
      $region24: #{tpu_custom_call.1} parent=5 // pred_fallthru
        _
      %p185 = scmp.le.s32.totalorder 1, %s16
      %p186 = scmp.lt.s32.totalorder %s16, 3
      %p187 = pnand %p185, %p186
      %p188 = pneg %p187
      // Predicated region
      $region29: #{tpu_custom_call.1} parent=5 // pred_check
        _
      $region30: #{tpu_custom_call.1} parent=5 // pred_check_branch
        %190 = sbr.rel (%p187) target = $region32
      $region31: #{tpu_custom_call.1} parent=5 // pred_region
        %s191 = ssub.s32 %s16, 1
        %s192 = sand.u32 %s41, 1
        %s193 = scalar_lea.sflag [#allocation4], %s192
        %s194 = sand.u32 %s41, 1
        %s195 = smul.addr %s194, 32
        %s196 = scalar_lea.vmem [#allocation3], %s195
        // Predicated region
        $region33: #{tpu_custom_call.1} parent=31 // pred_check
          %p197 = pneg %p54
        $region34: #{tpu_custom_call.1} parent=31 // pred_check_branch
          %199 = sbr.rel (%p197) target = $region36
        $region35: #{tpu_custom_call.1} parent=31 // pred_region
          %200 = dma.done %s193, 512
        $region36: #{tpu_custom_call.1} parent=31 // pred_fallthru
          _
        // Predicated region
        $region37: #{tpu_custom_call.1} parent=31 // pred_check
          %p201 = pneg %p80
        $region38: #{tpu_custom_call.1} parent=31 // pred_check_branch
          %203 = sbr.rel (%p201) target = $region40
        $region39: #{tpu_custom_call.1} parent=31 // pred_region
          %204 = dma.done [#allocation7], 128
        $region40: #{tpu_custom_call.1} parent=31 // pred_fallthru
          _
        %s205 = sand.u32 %s41, 1
        %s206 = scalar_lea.sflag [#allocation4], %s205
        %s207 = sand.u32 %s41, 1
        %s208 = smul.addr %s207, 32
        %s209 = scalar_lea.vmem [#allocation3], %s208
        %p210 = pneg %p54
        %p211 = pneg %p51
        %p212 = pneg %p80
        %p213 = pneg %p77
        %p214 = pneg %p101
        %p215 = pneg %p98
        %p216 = pneg %p129
        %p217 = pneg %p126
        %s218 = sand.u32 %s116, 1
        %s219 = scalar_lea.sflag [#allocation5], %s218
        %s220 = sand.u32 %s116, 1
        %s221 = smul.addr %s220, 8
        %s222 = scalar_lea.vmem [#allocation8], %s221
        %p223 = scmp.eq.s32.totalorder %s26, 0
        // Predicated region
        $region41: #{tpu_custom_call.1} parent=31 // pred_check
          %p224 = pneg %p223
        $region42: #{tpu_custom_call.1} parent=31 // pred_check_branch
          %226 = sbr.rel (%p224) target = $region44
        $region43: #{tpu_custom_call.1} parent=31 // pred_region
          %v227 = vld [vmem:[%s196] sm:$0xf]
          %228 = vst [vmem:[#allocation2] sm:$0xf] %v227
          %s229 = scalar_lea.vmem %s196, 8 [#allocation3]
          %v230 = vld [vmem:[%s229] sm:$0xf]
          %231 = vst [vmem:[#allocation2 + $0x4] sm:$0xf] %v230
          %v232 = vld [vmem:[%s196] sm:$0xff]
          %v234 = vcombine.high %v232, %v232
          %235 = vrot.lane.b32.xlu0 %v232, 127
          %v236 = vpop.permute.xlu0 %235
          %237 = vrot.lane.b32.xlu0 %v234, 127
          %v238 = vpop.permute.xlu0 %237
          %vm239 = vcmask 1039360
          %v240 = vsel %vm239, %v236, %v238
          %242 = vst [vmem:[#allocation2 + $0x8] sm:$0xf] %v240
          %v243 = vld [vmem:[%s229] sm:$0xff]
          %v245 = vcombine.high %v243, %v243
          %246 = vrot.lane.b32.xlu0 %v243, 127
          %v247 = vpop.permute.xlu0 %246
          %248 = vrot.lane.b32.xlu0 %v245, 127
          %v249 = vpop.permute.xlu0 %248
          %v250 = vsel %vm239, %v247, %v249
          %252 = vst [vmem:[#allocation2 + $0xc] sm:$0xf] %v250
          %s253 = scalar_lea.vmem %s196, 16 [#allocation3]
          %v254 = vld [vmem:[%s253] sm:$0xf]
          %255 = vst [vmem:[#allocation2 + $0x10] sm:$0xf] %v254
          %s256 = scalar_lea.vmem %s196, 24 [#allocation3]
          %v257 = vld [vmem:[%s256] sm:$0xf]
          %258 = vst [vmem:[#allocation2 + $0x14] sm:$0xf] %v257
          %v259 = vld [vmem:[%s253] sm:$0xff]
          %v261 = vcombine.high %v259, %v259
          %262 = vrot.lane.b32.xlu0 %v259, 127
          %v263 = vpop.permute.xlu0 %262
          %264 = vrot.lane.b32.xlu0 %v261, 127
          %v265 = vpop.permute.xlu0 %264
          %v266 = vsel %vm239, %v263, %v265
          %268 = vst [vmem:[#allocation2 + $0x18] sm:$0xf] %v266
          %v269 = vld [vmem:[%s256] sm:$0xff]
          %v271 = vcombine.high %v269, %v269
          %272 = vrot.lane.b32.xlu0 %v269, 127
          %v273 = vpop.permute.xlu0 %272
          %274 = vrot.lane.b32.xlu0 %v271, 127
          %v275 = vpop.permute.xlu0 %274
          %v276 = vsel %vm239, %v273, %v275
          %278 = vst [vmem:[#allocation2 + $0x1c] sm:$0xf] %v276
          %v279 = vld [vmem:[%s196] sm:$0xff]
          %v281 = vcombine.high %v279, %v279
          %282 = vrot.lane.b32.xlu0 %v279, 119
          %v283 = vpop.permute.xlu0 %282
          %284 = vrot.lane.b32.xlu0 %v281, 119
          %v285 = vpop.permute.xlu0 %284
          %vm286 = vcmask 973824
          %v287 = vsel %vm286, %v283, %v285
          %289 = vst [vmem:[#allocation2 + $0x20] sm:$0xf] %v287
          %v290 = vld [vmem:[%s229] sm:$0xff]
          %v292 = vcombine.high %v290, %v290
          %293 = vrot.lane.b32.xlu0 %v290, 119
          %v294 = vpop.permute.xlu0 %293
          %295 = vrot.lane.b32.xlu0 %v292, 119
          %v296 = vpop.permute.xlu0 %295
          %v297 = vsel %vm286, %v294, %v296
          %299 = vst [vmem:[#allocation2 + $0x24] sm:$0xf] %v297
          %v300 = vld [vmem:[%s196] sm:$0xff]
          %v302 = vcombine.high %v300, %v300
          %303 = vrot.lane.b32.xlu0 %v300, 118
          %v304 = vpop.permute.xlu0 %303
          %305 = vrot.lane.b32.xlu0 %v302, 118
          %v306 = vpop.permute.xlu0 %305
          %vm307 = vcmask 965632
          %v308 = vsel %vm307, %v304, %v306
          %310 = vst [vmem:[#allocation2 + $0x28] sm:$0xf] %v308
          %v311 = vld [vmem:[%s229] sm:$0xff]
          %v313 = vcombine.high %v311, %v311
          %314 = vrot.lane.b32.xlu0 %v311, 118
          %v315 = vpop.permute.xlu0 %314
          %316 = vrot.lane.b32.xlu0 %v313, 118
          %v317 = vpop.permute.xlu0 %316
          %v318 = vsel %vm307, %v315, %v317
          %320 = vst [vmem:[#allocation2 + $0x2c] sm:$0xf] %v318
          %v321 = vld [vmem:[%s253] sm:$0xff]
          %v323 = vcombine.high %v321, %v321
          %324 = vrot.lane.b32.xlu0 %v321, 119
          %v325 = vpop.permute.xlu0 %324
          %326 = vrot.lane.b32.xlu0 %v323, 119
          %v327 = vpop.permute.xlu0 %326
          %v328 = vsel %vm286, %v325, %v327
          %330 = vst [vmem:[#allocation2 + $0x30] sm:$0xf] %v328
          %v331 = vld [vmem:[%s256] sm:$0xff]
          %v333 = vcombine.high %v331, %v331
          %334 = vrot.lane.b32.xlu0 %v331, 119
          %v335 = vpop.permute.xlu0 %334
          %336 = vrot.lane.b32.xlu0 %v333, 119
          %v337 = vpop.permute.xlu0 %336
          %v338 = vsel %vm286, %v335, %v337
          %340 = vst [vmem:[#allocation2 + $0x34] sm:$0xf] %v338
          %v341 = vld [vmem:[%s253] sm:$0xff]
          %v343 = vcombine.high %v341, %v341
          %344 = vrot.lane.b32.xlu0 %v341, 118
          %v345 = vpop.permute.xlu0 %344
          %346 = vrot.lane.b32.xlu0 %v343, 118
          %v347 = vpop.permute.xlu0 %346
          %v348 = vsel %vm307, %v345, %v347
          %350 = vst [vmem:[#allocation2 + $0x38] sm:$0xf] %v348
          %v351 = vld [vmem:[%s256] sm:$0xff]
          %v353 = vcombine.high %v351, %v351
          %354 = vrot.lane.b32.xlu0 %v351, 118
          %v355 = vpop.permute.xlu0 %354
          %356 = vrot.lane.b32.xlu0 %v353, 118
          %v357 = vpop.permute.xlu0 %356
          %v358 = vsel %vm307, %v355, %v357
          %360 = vst [vmem:[#allocation2 + $0x3c] sm:$0xf] %v358
        $region44: #{tpu_custom_call.1} parent=31 // pred_fallthru
          _
        %v361 = vld [vmem:[#allocation6] sm:$0xff]
        %v362 = vld [vmem:[#allocation2] sm:$0xff]
        %v363 = vld [vmem:[#allocation2 + $0x8] sm:$0xff]
        %v364 = vld [vmem:[#allocation2 + $0x10] sm:$0xff]
        %v365 = vld [vmem:[#allocation2 + $0x18] sm:$0xff]
        %v366 = vld [vmem:[#allocation2 + $0x20] sm:$0xff]
        %v367 = vld [vmem:[#allocation2 + $0x28] sm:$0xff]
        %v368 = vld [vmem:[#allocation2 + $0x30] sm:$0xff]
        %v369 = vld [vmem:[#allocation2 + $0x38] sm:$0xff]
        %vm370 = vcmask 523264
        %v372 = vsel %vm370, %v361, 0
        %374 = vmatprep.subr.mxu0 0.0
        %375 = vmatpush1.msra.mxu0 0.0
        %376 = vmatprep.subr.mxu0 0.0
        %377 = vmatpush1.msra.mxu0 0.0
        %378 = vmatprep.subr.mxu0 0.0
        %379 = vmatpush1.msra.mxu0 0.0
        %380 = vmatprep.subr.mxu0 0.0
        %381 = vmatpush1.msra.mxu0 0.0
        %382 = vmatprep.subr.mxu0 0.0
        %383 = vmatpush1.msra.mxu0 0.0
        %384 = vmatprep.subr.mxu0 0.0
        %385 = vmatpush1.msra.mxu0 0.0
        %386 = vmatprep.subr.mxu0 0.0
        %387 = vmatpush1.msra.mxu0 0.0
        %388 = vmatprep.subr.mxu0 0.0
        %389 = vmatpush1.msra.mxu0 0.0
        %390 = vmatprep.subr.mxu0 0.0
        %391 = vmatpush1.msra.mxu0 %v369
        %392 = vmatprep.subr.mxu0 0.0
        %393 = vmatpush1.msra.mxu0 %v368
        %394 = vmatprep.subr.mxu0 0.0
        %395 = vmatpush1.msra.mxu0 %v367
        %396 = vmatprep.subr.mxu0 0.0
        %397 = vmatpush1.msra.mxu0 %v366
        %398 = vmatprep.subr.mxu0 0.0
        %399 = vmatpush1.msra.mxu0 %v365
        %400 = vmatprep.subr.mxu0 0.0
        %401 = vmatpush1.msra.mxu0 %v364
        %402 = vmatprep.subr.mxu0 0.0
        %403 = vmatpush1.msra.mxu0 %v363
        %404 = vmatprep.subr.mxu0 0.0
        %405 = vmatpush1.msra.mxu0 %v362
        %406 = vmatprep.subr.mxu0 0.0
        %407 = vmatpush2.msra.mxu0 0.0
        %408 = vmatprep.subr.mxu0 0.0
        %409 = vmatpush2.msra.mxu0 0.0
        %410 = vmatprep.subr.mxu0 0.0
        %411 = vmatpush2.msra.mxu0 0.0
        %412 = vmatprep.subr.mxu0 0.0
        %413 = vmatpush2.msra.mxu0 0.0
        %414 = vmatprep.subr.mxu0 0.0
        %415 = vmatpush2.msra.mxu0 0.0
        %416 = vmatprep.subr.mxu0 0.0
        %417 = vmatpush2.msra.mxu0 0.0
        %418 = vmatprep.subr.mxu0 0.0
        %419 = vmatpush2.msra.mxu0 0.0
        %420 = vmatprep.subr.mxu0 0.0
        %421 = vmatpush2.msra.mxu0 0.0
        %422 = vmatprep.subr.mxu0 0.0
        %423 = vmatpush2.msra.mxu0 0.0
        %424 = vmatprep.subr.mxu0 0.0
        %425 = vmatpush2.msra.mxu0 0.0
        %426 = vmatprep.subr.mxu0 0.0
        %427 = vmatpush2.msra.mxu0 0.0
        %428 = vmatprep.subr.mxu0 0.0
        %429 = vmatpush2.msra.mxu0 0.0
        %430 = vmatprep.subr.mxu0 0.0
        %431 = vmatpush2.msra.mxu0 0.0
        %432 = vmatprep.subr.mxu0 0.0
        %433 = vmatpush2.msra.mxu0 0.0
        %434 = vmatprep.subr.mxu0 0.0
        %435 = vmatpush2.msra.mxu0 0.0
        %436 = vmatprep.subr.mxu0 0.0
        %437 = vmatpush2.msra.mxu0 0.0
        %438 = vmatprep.mubr.f32.mxu0 0.0
        %439 = vmatmul.mubr.f32.gmra.mxu0 %v372
        %v440 = vpop.f32.mrf.mxu0
        %v441 = vadd.f32 0.0, %v440
        %v442 = vpop.f32.mrf.mxu0
        %443 = vdwg.mxu0
        %v444 = vld [vmem:[%s2] sm:$0x1]
        %v446 = vlaneseq
        %v447 = vshrl.u32 %v446, 7
        %v448 = vsub.s32 0, %v447
        %v449 = vrot.slane %v444, %v448
        %v451 = vmul.f32 %v441, %v449
        %452 = vadd.xlane.f32.xlu0 %v451
        %v453 = vpop.xlane.xlu0 %452
        %v454 = vmul.f32 %v453, 0.015625
        %v455 = vsub.f32 %v441, %v454
        %v456 = vmul.f32 %v455, %v449
        %v457 = vmul.f32 %v456, %v456
        %458 = vadd.xlane.f32.xlu0 %v457
        %v459 = vpop.xlane.xlu0 %458
        %v460 = vmul.f32 %v459, 0.015625
        %v461 = vadd.f32 %v460, 1e-05
        %v462 = vrsqrt.pop %v461
        %v463 = vmul.f32 %v455, %v462
        %vm464 = vcmp.ge.f32.partialorder %v463, 0.0
        %v465 = vmul.f32 %v463, 0.2
        %v466 = vsel %vm464, %v463, %v465
        %467 = vst [vmem:[%s222] sm:$0xff] %v466
        %s468 = sand.u32 %s116, 1
        %s469 = scalar_lea.sflag [#allocation5], %s468
        %s470 = sand.u32 %s116, 1
        %s471 = smul.addr %s470, 8
        %s472 = scalar_lea.vmem [#allocation8], %s471
        // Predicated region
        $region45: #{tpu_custom_call.1} parent=31 // pred_check
          %p473 = pneg %p126
        $region46: #{tpu_custom_call.1} parent=31 // pred_check_branch
          %475 = sbr.rel (%p473) target = $region48
        $region47: #{tpu_custom_call.1} parent=31 // pred_region
          %s477 = ssub.s32 128, 128
          %478 = vsyncadd %s469, %s477
          %s479 = sadd.s32 %s26, %s25
          %s480 = smul.addr %s479, 128
          %s481 = scalar_lea.hbm %s3, %s480
          %s483 = sshll.u32 %s472, 4
          %s484 = int_to_ptr.vmem [resolvable:$true] %s483
          %486 = dma.vmem_to_hbm [thread:$0]  %s484, 128, %s481, %s469
        $region48: #{tpu_custom_call.1} parent=31 // pred_fallthru
          _
      $region32: #{tpu_custom_call.1} parent=5 // pred_fallthru
        _
      %p487 = scmp.le.s32.totalorder 2, %s16
      // Predicated region
      $region49: #{tpu_custom_call.1} parent=5 // pred_check
        %p488 = pneg %p487
      $region50: #{tpu_custom_call.1} parent=5 // pred_check_branch
        %490 = sbr.rel (%p488) target = $region52
      $region51: #{tpu_custom_call.1} parent=5 // pred_region
        %s491 = ssub.s32 %s16, 2
        // Predicated region
        $region53: #{tpu_custom_call.1} parent=51 // pred_check
          %p492 = pneg %p132
        $region54: #{tpu_custom_call.1} parent=51 // pred_check_branch
          %494 = sbr.rel (%p492) target = $region56
        $region55: #{tpu_custom_call.1} parent=51 // pred_region
          %s495 = sand.u32 %s117, 1
          %s496 = scalar_lea.sflag [#allocation5], %s495
          %s497 = sand.u32 %s117, 1
          %s498 = smul.addr %s497, 8
          %s499 = scalar_lea.vmem [#allocation8], %s498
          %500 = dma.done %s496, 128
        $region56: #{tpu_custom_call.1} parent=51 // pred_fallthru
          _
      $region52: #{tpu_custom_call.1} parent=5 // pred_fallthru
        _
    $region6: #{tpu_custom_call.1} parent=1 // loop_footer
      %s20 = sadd.s32 1, %s16
    $region7: #{tpu_custom_call.1} parent=1 // loop_footer_branch
      %15 = sbr.rel target = $region3
    $region8: #{tpu_custom_call.1} parent=1 // loop_exit
      _
    %501 = vsyncpa [#allocation4], 1
    %s502 = scalar_lea.sflag [#allocation4], 1
    %503 = vsyncpa %s502, 1
    %504 = vsyncpa [#allocation7], 1
    %505 = vsyncpa [#allocation5], 1
    %s506 = scalar_lea.sflag [#allocation5], 1
    %507 = vsyncpa %s506, 1

</llo_original>
